<compile_context>
chip_gen: v5e
topology: v5e:2x2
jax: 0.10.0
libtpu: 0.0.40
codegen_flags: <defaults>
</compile_context>

<pallas_src>
import functools

import jax
import jax.numpy as jnp
from jax.experimental import pallas as pl
from jax.experimental.pallas import tpu as pltpu


# --------------------------------------------------------------------------
# Sizing helpers
# --------------------------------------------------------------------------
def _vmem_limit_bytes():
    """Scoped-VMEM limit: half of physical VMEM, capped at 64 MiB.

    v5e/v6e (128 MiB physical) -> 64 MiB ; v7x (64 MiB physical) -> 32 MiB.
    """
    cap = 64 << 20  # conservative default = v7x physical VMEM
    try:
        info = pltpu.get_tpu_info()
        cap = int(getattr(info, "vmem_capacity_bytes", cap))
    except Exception:
        pass
    return min(cap // 2, 64 << 20)


def _round_up(x, m):
    return ((x + m - 1) // m) * m


def _pick_lane_tile(hw, c, itemsize, budget_bytes):
    """Largest multiple-of-128 lane tile whose (c, tile) block fits budget."""
    hw128 = _round_up(hw, 128)
    lanes = (budget_bytes // max(1, c * itemsize)) // 128 * 128
    return int(min(hw128, max(128, lanes)))


def _grow_tile(hw_p, base, c, itemsize, budget_bytes):
    """Largest multiple of `base` that divides hw_p and fits budget_bytes."""
    lanes = (budget_bytes // max(1, c * itemsize)) // base * base
    max_lanes = max(base, lanes)
    q = hw_p // base
    best = base
    for k in range(1, q + 1):
        if q % k == 0 and base * k <= max_lanes:
            best = base * k
    return int(best)


def _maybe_buffered_spec(block_shape, index_map, depth):
    """BlockSpec with deeper pipelining when available; plain spec otherwise."""
    try:
        return pl.BlockSpec(block_shape, index_map,
                            pipeline_mode=pl.Buffered(depth))
    except (AttributeError, TypeError):
        return pl.BlockSpec(block_shape, index_map)


# --------------------------------------------------------------------------
# Kernels
# --------------------------------------------------------------------------
def _stats_kernel(x_ref, pivot_ref, sums_ref):
    """Per-batch, per-channel sum / sum-of-squares of (x - pivot).

    sums_ref block is (c, 2): col 0 = sum, col 1 = sum of squares. It is
    resident across the hw grid axis (axis 1) and distinct per batch index
    (axis 0), so the batch axis stays megacore-parallel on v7x.
    """
    @pl.when(pl.program_id(1) == 0)
    def _():
        sums_ref[...] = jnp.zeros_like(sums_ref)

    xc = x_ref[...].astype(jnp.float32) - pivot_ref[...]        # (c, thw)
    s = jnp.sum(xc, axis=-1, keepdims=True)                     # (c, 1)
    ss = jnp.sum(xc * xc, axis=-1, keepdims=True)               # (c, 1)
    sums_ref[...] += jnp.concatenate([s, ss], axis=-1)          # single RMW


def _norm_kernel(x_ref, sb_ref, o_ref, *, slope):
    """y = x * scale + bias, then leaky_relu (maximum form, 0 <= slope < 1)."""
    x = x_ref[...].astype(jnp.float32)                          # (c, thw)
    y = x * sb_ref[:, 0:1] + sb_ref[:, 1:2]                     # lane broadcast
    o_ref[...] = jnp.maximum(y, y * slope).astype(o_ref.dtype)


def _fused_kernel(x_ref, params_ref, o_ref, *, eps, slope, m):
    """Single-pass fast path: x fully VMEM-resident -> stats + affine + act."""
    x = x_ref[...].astype(jnp.float32)                          # (n, c, hw_p)
    gamma = params_ref[:, 0:1]                                  # (c, 1)
    beta = params_ref[:, 1:2]
    rmean = params_ref[:, 2:3]
    rvar = params_ref[:, 3:4]

    # Pivoted stats (pivot = running_mean; padded lanes are filled with the
    # pivot so they contribute ~0). Divide by the true element count m.
    xc = x - rmean[None, :, :]
    s = jnp.sum(jnp.sum(xc, axis=-1, keepdims=True), axis=0) / m       # (c, 1)
    ss = jnp.sum(jnp.sum(xc * xc, axis=-1, keepdims=True), axis=0) / m  # (c, 1)
    mean = rmean + s
    var_b = jnp.maximum(ss - s * s, 0.0)                        # biased batch var
    var_u = var_b * (m / (m - 1.0)) if m > 1 else var_b         # torch .var()

    rstd = jnp.sqrt(rvar + eps)
    r = jnp.sqrt(var_u + eps) / rstd
    d = (mean - rmean) / rstd
    w_eff = gamma * r
    b_eff = beta + gamma * d
    inv_std = jax.lax.rsqrt(var_b + eps)
    scale = w_eff * inv_std                                     # (c, 1)
    bias = b_eff - mean * scale                                 # (c, 1)

    y = x * scale[None, :, :] + bias[None, :, :]
    o_ref[...] = jnp.maximum(y, y * slope).astype(o_ref.dtype)


# --------------------------------------------------------------------------
# Wrapper
# --------------------------------------------------------------------------
def inplace_abr_sync_forward(x_nchw, gamma, beta, running_mean, running_var,
                             *, eps=1e-5, activation_param=0.01,
                             force_two_pass=False, lane_tile_cap=None):
    """x_nchw: (N, C, H, W). Returns activated, renormalized output (N, C, H, W)."""
    n, c, h, w = x_nchw.shape
    hw = h * w
    m = n * hw
    dtype = x_nchw.dtype
    itemsize = dtype.itemsize
    slope = float(activation_param)
    eps = float(eps)

    vmem_limit = _vmem_limit_bytes()

    # Pass-2 tile budget: in + out double-buffered in native dtype plus ~2 f32
    # upcast temps (counted in native-block equivalents).
    blocks2 = 4 + 2 * max(1, 4 // itemsize)
    tile2 = _pick_lane_tile(hw, c, itemsize, vmem_limit // blocks2)
    if lane_tile_cap is not None:
        tile2 = min(tile2, max(128, int(lane_tile_cap)))
    hw_p = _round_up(hw, tile2)
    pad = hw_p - hw

    x3 = x_nchw.reshape(n, c, hw)                 # free view, no transpose
    if pad:
        # Pad the lane axis with the per-channel pivot (running_mean) so the
        # padded elements contribute ~0 to the pivoted sums. Stats divide by
        # the true m; the padding is sliced off the output.
        fill = jnp.broadcast_to(
            running_mean.astype(dtype)[None, :, None], (n, c, pad))
        x3 = jnp.concatenate([x3, fill], axis=-1)

    gamma32 = gamma.astype(jnp.float32)
    beta32 = beta.astype(jnp.float32)
    rmean32 = running_mean.astype(jnp.float32)
    rvar32 = running_var.astype(jnp.float32)

    # ---- Fast path: whole x VMEM-resident -> single fused kernel ----------
    x_f32_bytes = n * c * hw_p * 4
    if (not force_two_pass) and (x_f32_bytes * 7 <= vmem_limit):
        params = jnp.stack([gamma32, beta32, rmean32, rvar32], axis=-1)  # (c,4)
        out3 = pl.pallas_call(
            functools.partial(_fused_kernel, eps=eps, slope=slope, m=float(m)),
            out_shape=jax.ShapeDtypeStruct((n, c, hw_p), dtype),
            grid_spec=pltpu.PrefetchScalarGridSpec(
                num_scalar_prefetch=0,
                grid=(1,),
                in_specs=[pl.BlockSpec((n, c, hw_p), lambda i: (0, 0, 0)),
                          pl.BlockSpec((c, 4), lambda i: (0, 0))],
                out_specs=pl.BlockSpec((n, c, hw_p), lambda i: (0, 0, 0))),
            input_output_aliases={0: 0},   # "in-place" when caller donates
            compiler_params=pltpu.CompilerParams(
                dimension_semantics=("arbitrary",),
                vmem_limit_bytes=vmem_limit),
        )(x3, params)
        out3 = out3[:, :, :hw] if pad else out3
        return out3.reshape(n, c, h, w)

    # ---- Pass 1: per-batch per-channel pivoted sum / sum-of-squares --------
    # Budget: up to 3 input buffers in native dtype + ~1 f32 upcast temp.
    blocks1 = 3 + max(1, 4 // itemsize)
    budget1 = vmem_limit // blocks1
    if lane_tile_cap is not None:
        budget1 = min(budget1, max(128, int(lane_tile_cap)) * c * itemsize)
    tile1 = _grow_tile(hw_p, tile2, c, itemsize, budget1)
    grid1 = (n, hw_p // tile1)

    if grid1[1] >= 3:
        x_spec1 = _maybe_buffered_spec((None, c, tile1),
                                       lambda ni, hi: (ni, 0, hi), 3)
    else:
        x_spec1 = pl.BlockSpec((None, c, tile1), lambda ni, hi: (ni, 0, hi))

    pivot = rmean32.reshape(c, 1)
    partial_sums = pl.pallas_call(
        _stats_kernel,
        out_shape=jax.ShapeDtypeStruct((n, c, 2), jnp.float32),
        grid_spec=pltpu.PrefetchScalarGridSpec(
            num_scalar_prefetch=0,
            grid=grid1,
            in_specs=[x_spec1,
                      pl.BlockSpec((c, 1), lambda ni, hi: (0, 0))],
            out_specs=pl.BlockSpec((None, c, 2), lambda ni, hi: (ni, 0, 0))),
        compiler_params=pltpu.CompilerParams(
            dimension_semantics=("parallel", "arbitrary"),
            vmem_limit_bytes=vmem_limit),
    )(x3, pivot)

    # ---- Tiny (C,)-sized per-channel math, hoisted out of the hot pass -----
    sums = jnp.sum(partial_sums, axis=0)            # (c, 2)
    s = sums[:, 0] / m
    ss = sums[:, 1] / m
    mean = rmean32 + s                              # un-pivot
    var_b = jnp.maximum(ss - s * s, 0.0)            # biased batch var
    var_u = var_b * (m / (m - 1)) if m > 1 else var_b

    rstd = jnp.sqrt(rvar32 + eps)
    r = jnp.sqrt(var_u + eps) / rstd
    d = (mean - rmean32) / rstd
    w_eff = gamma32 * r
    b_eff = beta32 + gamma32 * d
    inv_std = jax.lax.rsqrt(var_b + eps)
    scale = w_eff * inv_std
    bias = b_eff - mean * scale
    sb = jnp.stack([scale, bias], axis=-1)          # (c, 2) packed scale/bias

    # ---- Pass 2: fully parallel elementwise affine + leaky_relu ------------
    grid2 = (n, hw_p // tile2)
    x_spec2 = pl.BlockSpec((None, c, tile2), lambda ni, hi: (ni, 0, hi))

    out3 = pl.pallas_call(
        functools.partial(_norm_kernel, slope=slope),
        out_shape=jax.ShapeDtypeStruct((n, c, hw_p), dtype),
        grid_spec=pltpu.PrefetchScalarGridSpec(
            num_scalar_prefetch=0,
            grid=grid2,
            in_specs=[x_spec2,
                      pl.BlockSpec((c, 2), lambda ni, hi: (0, 0))],
            out_specs=x_spec2),
        input_output_aliases={0: 0},   # "in-place" when caller donates
        compiler_params=pltpu.CompilerParams(
            dimension_semantics=("parallel", "parallel"),
            vmem_limit_bytes=vmem_limit),
    )(x3, sb)

    out3 = out3[:, :, :hw] if pad else out3
    return out3.reshape(n, c, h, w)


# --------------------------------------------------------------------------
# Pure-JAX reference and self-test
# --------------------------------------------------------------------------
def _reference(x_nchw, gamma, beta, running_mean, running_var,
               eps=1e-5, slope=0.01):
    """Pure-JAX reference mirroring the PyTorch module (training mode)."""
    xt = jnp.transpose(x_nchw, (1, 0, 2, 3)).reshape(x_nchw.shape[1], -1)
    m = xt.shape[1]
    mean = jnp.mean(xt, axis=1)
    var_b = jnp.mean((xt - mean[:, None]) ** 2, axis=1)
    var_u = var_b * (m / (m - 1))
    rstd = jnp.sqrt(running_var + eps)
    r = jnp.sqrt(var_u + eps) / rstd
    d = (mean - running_mean) / rstd
    w = gamma * r
    b = beta + gamma * d
    y = (x_nchw - mean[None, :, None, None]) / jnp.sqrt(
        var_b[None, :, None, None] + eps) * w[None, :, None, None] \
        + b[None, :, None, None]
    return jnp.where(y >= 0, y, y * slope)


if __name__ == "__main__":
    key = jax.random.PRNGKey(0)

    # (N, C, H, W, use_default_buffers, lane_tile_cap)
    cases = [
        (2, 4, 16, 16, True, None),   # aligned HW, module-default buffers
        (2, 4, 15, 15, False, None),  # unaligned HW -> lane-padding path
        (2, 4, 16, 24, False, 128),   # multi-tile hw axis (accumulator loop)
    ]

    for idx, (N, C, H, W, default_buffers, cap) in enumerate(cases):
        k = jax.random.fold_in(key, idx)
        x = jax.random.normal(k, (N, C, H, W), dtype=jnp.float32) * 2.0 + 0.5

        if default_buffers:
            # ABR.reset_parameters(): weight=1, bias=0, running_mean=0, var=1
            gamma = jnp.ones((C,), jnp.float32)
            beta = jnp.zeros((C,), jnp.float32)
            running_mean = jnp.zeros((C,), jnp.float32)
            running_var = jnp.ones((C,), jnp.float32)
        else:
            # Non-trivial buffers to exercise the renorm (r, d) math.
            gamma = 1.0 + 0.1 * jnp.arange(C, dtype=jnp.float32)
            beta = 0.05 * jnp.arange(C, dtype=jnp.float32)
            running_mean = 0.1 * jnp.arange(C, dtype=jnp.float32)
            running_var = 1.0 + 0.05 * jnp.arange(C, dtype=jnp.float32)

        ref = jax.block_until_ready(
            _reference(x, gamma, beta, running_mean, running_var))

        # Fused fast path (default dispatch at these sizes).
        out_fast = jax.block_until_ready(
            inplace_abr_sync_forward(x, gamma, beta, running_mean, running_var))
        assert out_fast.shape == (N, C, H, W)
        err_fast = float(jnp.max(jnp.abs(out_fast - ref)))
        assert err_fast < 2e-4, f"case {idx} fast-path mismatch: {err_fast}"

        # Two-pass path (forced), with a small lane-tile cap on the last case
        # so the per-batch accumulator runs over multiple hw grid steps.
        out_tp = jax.block_until_ready(
            inplace_abr_sync_forward(x, gamma, beta, running_mean, running_var,
                                     force_two_pass=True, lane_tile_cap=cap))
        err_tp = float(jnp.max(jnp.abs(out_tp - ref)))
        assert err_tp < 2e-4, f"case {idx} two-pass mismatch: {err_tp}"

    print("KERNEL_OK")
</pallas_src>

<mosaic_0001>
module attributes {stable_mosaic.version = 11 : i64} {
  func.func @_fused_kernel(%arg0: i32, %arg1: memref<2x4x256xf32, #tpu.memory_space<vmem>>, %arg2: memref<4x4xf32, #tpu.memory_space<vmem>>, %arg3: memref<2x4x256xf32, #tpu.memory_space<vmem>>) attributes {dimension_semantics = [#tpu.dimension_semantics<arbitrary>], iteration_bounds = array<i64: 1>, scalar_prefetch = 0 : i64, scratch_operands = 0 : i64, tpu.core_type = #tpu.core_type<tc>, window_params = [{pipeline_mode = #tpu.pipeline_mode<synchronous>, transform_indices = @transform_0, window_bounds = array<i64: 2, 4, 256>}, {pipeline_mode = #tpu.pipeline_mode<synchronous>, transform_indices = @transform_1, window_bounds = array<i64: 4, 4>}, {pipeline_mode = #tpu.pipeline_mode<synchronous>, transform_indices = @transform_2, window_bounds = array<i64: 2, 4, 256>}]} {
    %c0 = arith.constant 0 : index
    %c0_0 = arith.constant 0 : index
    %c0_1 = arith.constant 0 : index
    %0 = vector.load %arg1[%c0, %c0_0, %c0_1] : memref<2x4x256xf32, #tpu.memory_space<vmem>>, vector<2x4x256xf32>
    %c0_2 = arith.constant 0 : index
    %c0_3 = arith.constant 0 : index
    %1 = vector.load %arg2[%c0_2, %c0_3] : memref<4x4xf32, #tpu.memory_space<vmem>>, vector<4x1xf32>
    %c0_4 = arith.constant 0 : index
    %c1 = arith.constant 1 : index
    %2 = vector.load %arg2[%c0_4, %c1] : memref<4x4xf32, #tpu.memory_space<vmem>>, vector<4x1xf32>
    %c0_5 = arith.constant 0 : index
    %c2 = arith.constant 2 : index
    %3 = vector.load %arg2[%c0_5, %c2] : memref<4x4xf32, #tpu.memory_space<vmem>>, vector<4x1xf32>
    %c0_6 = arith.constant 0 : index
    %c3 = arith.constant 3 : index
    %4 = vector.load %arg2[%c0_6, %c3] : memref<4x4xf32, #tpu.memory_space<vmem>>, vector<4x1xf32>
    %5 = vector.shape_cast %3 : vector<4x1xf32> to vector<1x4x1xf32>
    %6 = vector.broadcast %5 : vector<1x4x1xf32> to vector<2x4x256xf32>
    %7 = arith.subf %0, %6 : vector<2x4x256xf32>
    %cst = arith.constant dense<0.000000e+00> : vector<2x4xf32>
    %8 = vector.multi_reduction <add>, %7, %cst [2] : vector<2x4x256xf32> to vector<2x4xf32>
    %9 = vector.shape_cast %8 : vector<2x4xf32> to vector<2x4x1xf32>
    %cst_7 = arith.constant dense<0.000000e+00> : vector<4x1xf32>
    %10 = vector.multi_reduction <add>, %9, %cst_7 [0] : vector<2x4x1xf32> to vector<4x1xf32>
    %cst_8 = arith.constant 5.120000e+02 : f32
    %11 = vector.broadcast %cst_8 : f32 to vector<4x1xf32>
    %12 = arith.divf %10, %11 : vector<4x1xf32>
    %13 = arith.mulf %7, %7 : vector<2x4x256xf32>
    %cst_9 = arith.constant dense<0.000000e+00> : vector<2x4xf32>
    %14 = vector.multi_reduction <add>, %13, %cst_9 [2] : vector<2x4x256xf32> to vector<2x4xf32>
    %15 = vector.shape_cast %14 : vector<2x4xf32> to vector<2x4x1xf32>
    %cst_10 = arith.constant dense<0.000000e+00> : vector<4x1xf32>
    %16 = vector.multi_reduction <add>, %15, %cst_10 [0] : vector<2x4x1xf32> to vector<4x1xf32>
    %cst_11 = arith.constant 5.120000e+02 : f32
    %17 = vector.broadcast %cst_11 : f32 to vector<4x1xf32>
    %18 = arith.divf %16, %17 : vector<4x1xf32>
    %19 = arith.addf %3, %12 : vector<4x1xf32>
    %20 = arith.mulf %12, %12 : vector<4x1xf32>
    %21 = arith.subf %18, %20 : vector<4x1xf32>
    %cst_12 = arith.constant 0.000000e+00 : f32
    %22 = vector.broadcast %cst_12 : f32 to vector<4x1xf32>
    %23 = arith.maximumf %21, %22 : vector<4x1xf32>
    %cst_13 = arith.constant 1.00195694 : f32
    %24 = vector.broadcast %cst_13 : f32 to vector<4x1xf32>
    %25 = arith.mulf %23, %24 : vector<4x1xf32>
    %cst_14 = arith.constant 9.99999974E-6 : f32
    %26 = vector.broadcast %cst_14 : f32 to vector<4x1xf32>
    %27 = arith.addf %4, %26 : vector<4x1xf32>
    %28 = math.sqrt %27 : vector<4x1xf32>
    %cst_15 = arith.constant 9.99999974E-6 : f32
    %29 = vector.broadcast %cst_15 : f32 to vector<4x1xf32>
    %30 = arith.addf %25, %29 : vector<4x1xf32>
    %31 = math.sqrt %30 : vector<4x1xf32>
    %32 = arith.divf %31, %28 : vector<4x1xf32>
    %33 = arith.subf %19, %3 : vector<4x1xf32>
    %34 = arith.divf %33, %28 : vector<4x1xf32>
    %35 = arith.mulf %1, %32 : vector<4x1xf32>
    %36 = arith.mulf %1, %34 : vector<4x1xf32>
    %37 = arith.addf %2, %36 : vector<4x1xf32>
    %cst_16 = arith.constant 9.99999974E-6 : f32
    %38 = vector.broadcast %cst_16 : f32 to vector<4x1xf32>
    %39 = arith.addf %23, %38 : vector<4x1xf32>
    %40 = math.rsqrt %39 : vector<4x1xf32>
    %41 = arith.mulf %35, %40 : vector<4x1xf32>
    %42 = arith.mulf %19, %41 : vector<4x1xf32>
    %43 = arith.subf %37, %42 : vector<4x1xf32>
    %44 = vector.shape_cast %41 : vector<4x1xf32> to vector<1x4x1xf32>
    %45 = vector.broadcast %44 : vector<1x4x1xf32> to vector<2x4x256xf32>
    %46 = arith.mulf %0, %45 : vector<2x4x256xf32>
    %47 = vector.shape_cast %43 : vector<4x1xf32> to vector<1x4x1xf32>
    %48 = vector.broadcast %47 : vector<1x4x1xf32> to vector<2x4x256xf32>
    %49 = arith.addf %46, %48 : vector<2x4x256xf32>
    %cst_17 = arith.constant 0.00999999977 : f32
    %50 = vector.broadcast %cst_17 : f32 to vector<2x4x256xf32>
    %51 = arith.mulf %49, %50 : vector<2x4x256xf32>
    %52 = arith.maximumf %49, %51 : vector<2x4x256xf32>
    %c0_18 = arith.constant 0 : index
    %c0_19 = arith.constant 0 : index
    %c0_20 = arith.constant 0 : index
    %53 = vector.load %arg3[%c0_18, %c0_19, %c0_20] : memref<2x4x256xf32, #tpu.memory_space<vmem>>, vector<2x4x256xf32>
    tpu.vector_store %arg3[%c0_18, %c0_19, %c0_20], %52 {strides = array<i32>} : memref<2x4x256xf32, #tpu.memory_space<vmem>>, vector<2x4x256xf32>,
    return
  }
  func.func @transform_0(%arg0: i32) -> (i32, i32, i32) {
    %c0_i32 = arith.constant 0 : i32
    %c0_i32_0 = arith.constant 0 : i32
    %c0_i32_1 = arith.constant 0 : i32
    %c0_i32_2 = arith.constant 0 : i32
    return %c0_i32, %c0_i32_0, %c0_i32_1 : i32, i32, i32
  }
  func.func @transform_1(%arg0: i32) -> (i32, i32) {
    %c0_i32 = arith.constant 0 : i32
    %c0_i32_0 = arith.constant 0 : i32
    %c0_i32_1 = arith.constant 0 : i32
    return %c0_i32, %c0_i32_0 : i32, i32
  }
  func.func @transform_2(%arg0: i32) -> (i32, i32, i32) {
    %c0_i32 = arith.constant 0 : i32
    %c0_i32_0 = arith.constant 0 : i32
    %c0_i32_1 = arith.constant 0 : i32
    %c0_i32_2 = arith.constant 0 : i32
    return %c0_i32, %c0_i32_0, %c0_i32_1 : i32, i32, i32
  }
}

</mosaic_0001>

<llo_original>
// kernel: tpu_custom_call.1
$region0: #{tpu_custom_call.1}
  #allocation0 [shape = 'u32[]', space=smem, size = 0x4, offset = 0x4, fixed_abs, tag = 'smem constant byte address 0x4 - core index']
  #allocation1 [shape = 'u32[72,128]{1,0:T(1,128)}', space=vmem, size = 0x9000, scoped, tag = 'internal scratch']
  %s0 = inlined_call_operand.hbm [shape: f32[2,4,256], index: 0, kind: input, shape index: {}, may-alias: {0,2}]
  %s1 = inlined_call_operand.vmem [shape: f32[4,4], index: 1, kind: input, shape index: {}]
  %s2 = inlined_call_operand.hbm [shape: f32[2,4,256], index: 2, kind: output, shape index: {}, may-alias: {0,2}]
  %s3 = sld [smem:[#allocation0]]
  $region22: #{tpu_custom_call.1} parent=0
    _
  %s5 = ssub.s32 1, %s3
  %s6 = scalar_select 0, %s5, %s3
  $region1: #{tpu_custom_call.1} parent=0
    #allocation2 [shape = 'u8[8192]{0}', space=vmem, size = 0x2000, scoped, tag = 'input window, operand 0, single buffered']
    #allocation3 [shape = 's32[1]{0}', space=sflag, size = 0x4, scoped, tag = 'scoped memory for tpu_custom_call.1']
    #allocation4 [shape = 's32[1]{0}', space=sflag, size = 0x4, scoped, tag = 'scoped memory for tpu_custom_call.1']
    #allocation5 [shape = 'u8[8192]{0}', space=vmem, size = 0x2000, scoped, tag = 'output window, operand 0, single buffered']
    %7 = vsyncpa [#allocation3], 0
    %8 = vsyncpa [#allocation4], 0
    // Predicated region
    $region2: #{tpu_custom_call.1} parent=1 // pred_check
      _
    $region3: #{tpu_custom_call.1} parent=1 // pred_check_branch
      %10 = sbr.rel (0) target = $region5
    $region4: #{tpu_custom_call.1} parent=1 // pred_region
      %12 = vsyncadd [#allocation3], 0
      %s13 = sshll.u32 %s0, 4
      %s14 = int_to_ptr.hbm [resolvable:$true] %s13
      %s15 = sshll.u32 [#allocation2], 4
      %s16 = int_to_ptr.vmem [resolvable:$true] %s15
      %21 = dma.hbm_to_vmem [thread:$0]  %s14, 256, %s16, [#allocation3], 128, 128, 8
    $region5: #{tpu_custom_call.1} parent=1 // pred_fallthru
      _
    // Predicated region
    $region6: #{tpu_custom_call.1} parent=1 // pred_check
      _
    $region7: #{tpu_custom_call.1} parent=1 // pred_check_branch
      %23 = sbr.rel (0) target = $region9
    $region8: #{tpu_custom_call.1} parent=1 // pred_region
      _
    $region9: #{tpu_custom_call.1} parent=1 // pred_fallthru
      _
    // Predicated region
    $region10: #{tpu_custom_call.1} parent=1 // pred_check
      _
    $region11: #{tpu_custom_call.1} parent=1 // pred_check_branch
      %25 = sbr.rel (0) target = $region13
    $region12: #{tpu_custom_call.1} parent=1 // pred_region
      %27 = dma.done [#allocation3], 256
    $region13: #{tpu_custom_call.1} parent=1 // pred_fallthru
      _
    %v28 = vld [vmem:[#allocation2] sm:$0xff]
    %v29 = vld [vmem:[#allocation2 + $0x8] sm:$0xff]
    %v30 = vld [vmem:[%s1] sm:$0xf]
    %32 = vset.pattern.permute.xlu0 2
    %33 = vperm.xlu0 %32, %v30
    %v34 = vpop.permute.xlu0 %33
    %v36 = vunpack.c.l.s4 839922192
    %v37 = vunpack.c.0.s8 %v36
    %v38 = vperm.slane %v34, %v37
    %v40 = vsub.f32 %v28, %v38
    %v41 = vsub.f32 %v29, %v38
    %44 = vst [vmem:[#allocation1] ss:$2 sm:$0xff] %v40
    %v45 = vld.sshfl [vmem:[#allocation1] sm:$0xff pattern:$0x75316420]
    %v46 = vld.sshfl [vmem:[#allocation1 + $0x8] sm:$0xff pattern:$0x75316420]
    %s47 = scalar_lea.vmem [#allocation1], 16
    %48 = vst [vmem:[%s47] ss:$2 sm:$0xff] %v41
    %v49 = vld.sshfl [vmem:[#allocation1 + $0x10] sm:$0xff pattern:$0x75316420]
    %v50 = vld.sshfl [vmem:[#allocation1 + $0x18] sm:$0xff pattern:$0x75316420]
    %vm55 = vcmask 1043456
    %v56 = vsel %vm55, %v45, 0.0
    %v57 = vsel %vm55, %v46, 0.0
    %v58 = vadd.f32 %v56, %v57
    %59 = vadd.xlane.f32.xlu0 %v58
    %v60 = vpop.xlane.xlu0 %59
    %v61 = vsel %vm55, %v49, 0.0
    %v62 = vsel %vm55, %v50, 0.0
    %v63 = vadd.f32 %v61, %v62
    %64 = vadd.xlane.f32.xlu0 %v63
    %v65 = vpop.xlane.xlu0 %64
    %v66 = vsel %vm55, %v60, 0.0
    %v67 = vsel %vm55, %v65, 0.0
    %v68 = vadd.f32 %v66, %v67
    %v69 = vrcp.pop 512.0
    %v70 = vmul.f32 512.0, %v69
    %v71 = vsub.f32 1.0, %v70
    %v72 = vmul.f32 %v69, %v71
    %v73 = vadd.f32 %v69, %v72
    %vm74 = vweird.f32 %v69
    %v75 = vsel %vm74, %v69, %v73
    %v76 = vmul.f32 %v68, %v75
    %v77 = vmul.f32 %v40, %v40
    %v78 = vmul.f32 %v41, %v41
    %81 = vst [vmem:[#allocation1] ss:$2 sm:$0xff] %v77
    %v82 = vld.sshfl [vmem:[#allocation1] sm:$0xff pattern:$0x75316420]
    %v83 = vld.sshfl [vmem:[#allocation1 + $0x8] sm:$0xff pattern:$0x75316420]
    %s84 = scalar_lea.vmem [#allocation1], 16
    %85 = vst [vmem:[%s84] ss:$2 sm:$0xff] %v78
    %v86 = vld.sshfl [vmem:[#allocation1 + $0x10] sm:$0xff pattern:$0x75316420]
    %v87 = vld.sshfl [vmem:[#allocation1 + $0x18] sm:$0xff pattern:$0x75316420]
    %v92 = vsel %vm55, %v82, 0.0
    %v93 = vsel %vm55, %v83, 0.0
    %v94 = vadd.f32 %v92, %v93
    %95 = vadd.xlane.f32.xlu0 %v94
    %v96 = vpop.xlane.xlu0 %95
    %v97 = vsel %vm55, %v86, 0.0
    %v98 = vsel %vm55, %v87, 0.0
    %v99 = vadd.f32 %v97, %v98
    %100 = vadd.xlane.f32.xlu0 %v99
    %v101 = vpop.xlane.xlu0 %100
    %v102 = vsel %vm55, %v96, 0.0
    %v103 = vsel %vm55, %v101, 0.0
    %v104 = vadd.f32 %v102, %v103
    %v105 = vmul.f32 %v104, %v75
    %v106 = vadd.f32 %v30, %v76
    %v107 = vmul.f32 %v76, %v76
    %v108 = vsub.f32 %v105, %v107
    %v109 = vmax.f32 %v108, 0.0
    %v110 = vmul.f32 %v109, 1.0019569
    %v111 = vadd.f32 %v30, 1e-05
    %v112 = vrsqrt.pop %v111
    %v113 = vmul.f32 %v112, %v111
    %v114 = vmul.f32 %v113, %v112
    %v115 = vmul.f32 0.5, %v114
    %v116 = vsub.f32 1.5, %v115
    %v117 = vmul.f32 %v112, %v116
    %v118 = vmul.f32 %v111, %v117
    %vm119 = vcmp.eq.f32.partialorder %v111, inf
    %v120 = vsel %vm119, %v111, %v118
    %vm121 = vcmp.eq.f32.partialorder %v111, 0.0
    %v122 = vand.u32 %v111, 2147483648
    %v123 = vsel %vm121, %v122, %v120
    %v124 = vadd.f32 %v110, 1e-05
    %v125 = vrsqrt.pop %v124
    %v126 = vmul.f32 %v125, %v124
    %v127 = vmul.f32 %v126, %v125
    %v128 = vmul.f32 0.5, %v127
    %v129 = vsub.f32 1.5, %v128
    %v130 = vmul.f32 %v125, %v129
    %v131 = vmul.f32 %v124, %v130
    %vm132 = vcmp.eq.f32.partialorder %v124, inf
    %v133 = vsel %vm132, %v124, %v131
    %vm134 = vcmp.eq.f32.partialorder %v124, 0.0
    %v135 = vand.u32 %v124, 2147483648
    %v136 = vsel %vm134, %v135, %v133
    %v137 = vrcp.pop %v123
    %v138 = vmul.f32 %v123, %v137
    %v139 = vsub.f32 1.0, %v138
    %v140 = vmul.f32 %v137, %v139
    %v141 = vadd.f32 %v137, %v140
    %vm142 = vweird.f32 %v123
    %vm143 = vweird.f32 %v137
    %vm144 = vmor %vm142, %vm143
    %v145 = vsel %vm144, %v137, %v141
    %v146 = vand.u32 2147483647, %v123
    %vm147 = vcmp.eq.f32.partialorder %v146, 8.507059e+37
    %v148 = vand.u32 %v123, 2147483648
    %v149 = vor.u32 1.1754944e-38, %v148
    %v150 = vsel %vm147, %v149, %v145
    %v151 = vmul.f32 %v136, %v150
    %v152 = vsub.f32 %v106, %v30
    %154 = vrot.lane.b32.xlu0 %v123, 127
    %v155 = vpop.permute.xlu0 %154
    %v157 = vrcp.pop %v155
    %v158 = vmul.f32 %v155, %v157
    %v159 = vsub.f32 1.0, %v158
    %v160 = vmul.f32 %v157, %v159
    %v161 = vadd.f32 %v157, %v160
    %vm162 = vweird.f32 %v155
    %vm163 = vweird.f32 %v157
    %vm164 = vmor %vm162, %vm163
    %v165 = vsel %vm164, %v157, %v161
    %v166 = vand.u32 2147483647, %v155
    %vm167 = vcmp.eq.f32.partialorder %v166, 8.507059e+37
    %v168 = vand.u32 %v155, 2147483648
    %v169 = vor.u32 1.1754944e-38, %v168
    %v170 = vsel %vm167, %v169, %v165
    %v171 = vmul.f32 %v152, %v170
    %173 = vrot.lane.b32.xlu0 %v151, 125
    %v174 = vpop.permute.xlu0 %173
    %v176 = vmul.f32 %v30, %v174
    %178 = vrot.lane.b32.xlu0 %v171, 126
    %v179 = vpop.permute.xlu0 %178
    %v181 = vmul.f32 %v30, %v179
    %183 = vrot.lane.b32.xlu0 %v181, 1
    %v184 = vpop.permute.xlu0 %183
    %v186 = vadd.f32 %v30, %v184
    %v187 = vadd.f32 %v109, 1e-05
    %v188 = vrsqrt.pop %v187
    %v189 = vmul.f32 %v188, %v187
    %v190 = vmul.f32 %v189, %v188
    %v191 = vmul.f32 0.5, %v190
    %v192 = vsub.f32 1.5, %v191
    %v193 = vmul.f32 %v188, %v192
    %vm194 = vweird.f32 %v187
    %vm195 = vweird.f32 %v188
    %vm196 = vmor %vm194, %vm195
    %v197 = vsel %vm196, %v188, %v193
    %v198 = vmul.f32 %v176, %v197
    %200 = vrot.lane.b32.xlu0 %v198, 2
    %v201 = vpop.permute.xlu0 %200
    %v203 = vmul.f32 %v106, %v201
    %205 = vrot.lane.b32.xlu0 %v203, 127
    %v206 = vpop.permute.xlu0 %205
    %v208 = vsub.f32 %v186, %v206
    %209 = vset.pattern.permute.xlu0 0
    %210 = vperm.xlu0 %209, %v198
    %v211 = vpop.permute.xlu0 %210
    %v213 = vunpack.c.l.s4 839922192
    %v214 = vunpack.c.0.s8 %v213
    %v215 = vperm.slane %v211, %v214
    %v217 = vmul.f32 %v28, %v215
    %v218 = vmul.f32 %v29, %v215
    %220 = vset.pattern.permute.xlu0 1
    %221 = vperm.xlu0 %220, %v208
    %v222 = vpop.permute.xlu0 %221
    %v224 = vunpack.c.l.s4 839922192
    %v225 = vunpack.c.0.s8 %v224
    %v226 = vperm.slane %v222, %v225
    %v228 = vadd.f32 %v217, %v226
    %v229 = vadd.f32 %v218, %v226
    %v230 = vmul.f32 %v228, 0.01
    %v231 = vmul.f32 %v229, 0.01
    %v232 = vmax.f32 %v228, %v230
    %v233 = vmax.f32 %v229, %v231
    %234 = vst [vmem:[#allocation5] sm:$0xff] %v232
    %235 = vst [vmem:[#allocation5 + $0x8] sm:$0xff] %v233
    // Predicated region
    $region14: #{tpu_custom_call.1} parent=1 // pred_check
      _
    $region15: #{tpu_custom_call.1} parent=1 // pred_check_branch
      %237 = sbr.rel (0) target = $region17
    $region16: #{tpu_custom_call.1} parent=1 // pred_region
      %239 = vsyncadd [#allocation4], 0
      %s240 = sshll.u32 [#allocation5], 4
      %s241 = int_to_ptr.vmem [resolvable:$true] %s240
      %s242 = sshll.u32 %s2, 4
      %s243 = int_to_ptr.hbm [resolvable:$true] %s242
      %248 = dma.vmem_to_hbm [thread:$0]  %s241, 256, %s243, [#allocation4], 128, 128, 8
    $region17: #{tpu_custom_call.1} parent=1 // pred_fallthru
      _
    // Predicated region
    $region18: #{tpu_custom_call.1} parent=1 // pred_check
      _
    $region19: #{tpu_custom_call.1} parent=1 // pred_check_branch
      %250 = sbr.rel (0) target = $region21
    $region20: #{tpu_custom_call.1} parent=1 // pred_region
      %252 = dma.done [#allocation4], 256
    $region21: #{tpu_custom_call.1} parent=1 // pred_fallthru
      _
    %253 = vsyncpa [#allocation3], 1
    %254 = vsyncpa [#allocation4], 1

</llo_original>
